<compile_context>
chip_gen: v5e
topology: v5e:2x2
jax: 0.10.0
libtpu: 0.0.40
codegen_flags: <defaults>
</compile_context>

<pallas_src>
import math

import jax
import jax.numpy as jnp
from jax import lax
from jax.experimental import pallas as pl
from jax.experimental.pallas import tpu as pltpu

# Constraint bounds from the PyTorch module.
_LOC_MIN, _LOC_MAX = -0.1, 0.1
_SCALE_MIN, _SCALE_MAX = 1e-12, 0.1

_LANE = 128
_WIDTHS = (1024, 512, 256, 128)     # lane-dense widths tried before padding
_SUB_ROWS = 8                       # rows per in-kernel sub-tile (1 sublane tile)
_DEFAULT_BLOCK_ELEMS = 512 * 1024   # ~2 MiB (f32) per input buffer per grid step

_LN2 = 0.6931471805599453


def _hash32(gidx, seed_mix):
    """One-round 32-bit mixer (lowbias32): 2 multiplies + 3 xor-shifts."""
    h = gidx ^ seed_mix
    h = h ^ (h >> jnp.uint32(16))
    h = h * jnp.uint32(0x7FEB352D)
    h = h ^ (h >> jnp.uint32(15))
    h = h * jnp.uint32(0x846CA68B)
    h = h ^ (h >> jnp.uint32(16))
    return h


def _uniform_from_bits(h):
    """uint32 -> f32 uniform in (0, 1) via the mantissa bit-trick (23 bits)."""
    vbits = (h >> jnp.uint32(9)) | jnp.uint32(0x3F800000)   # bits of a float in [1, 2)
    v = pltpu.bitcast(vbits, jnp.float32)
    # Shift to [2^-24, 1 - 2^-24]: strictly inside (0, 1) so log stays finite.
    return v - jnp.float32(1.0 - 2.0 ** -24)


def _neg2_log(pt):
    """-2*ln(pt) for pt in (0, 0.5], via exponent extraction + short atanh series.

    ~12 VALU ops + one EUP reciprocal; abs error ~1e-3, which is negligible once
    divided by t >= sqrt(2 ln 2) and scaled by sigma <= 0.1.
    """
    bits = pltpu.bitcast(pt, jnp.int32)                       # pt > 0 -> sign bit 0
    e = ((bits >> 23) - 127).astype(jnp.float32)              # unbiased exponent
    m = pltpu.bitcast((bits & 0x007FFFFF) | 0x3F800000, jnp.float32)  # mantissa in [1,2)
    s = (m - 1.0) * pl.reciprocal(m + 1.0, approx=True)       # atanh arg, |s| <= 1/3
    s2 = s * s
    # -2*ln(m) = -2*(2s + (2/3)s^3 + (2/5)s^5)
    neg2_ln_m = s * (-4.0 + s2 * (-4.0 / 3.0 + s2 * -0.8))
    return e * jnp.float32(-2.0 * _LN2) + neg2_ln_m


def _std_normal_from_u(u):
    """Single-branch inverse normal CDF (Hastings / A&S 26.2.23, |err| < 4.5e-4)."""
    neg = u < 0.5
    pt = jnp.minimum(u, 1.0 - u)                 # (0, 0.5]
    w = _neg2_log(pt)                            # -2 ln(pt) >= 2 ln 2
    t = w * lax.rsqrt(w)                         # sqrt(w); rsqrt -> EUP
    num = 2.515517 + t * (0.802853 + t * 0.010328)
    den = 1.0 + t * (1.432788 + t * (0.189269 + t * 0.001308))
    zmag = t - num * pl.reciprocal(den, approx=True)
    return jnp.where(neg, -zmag, zmag)


def _noise_add_kernel(seed_ref, params_ref, x_ref, o_ref):
    """out = x + loc + scale * z over one lane-dense block, in 8-row sub-tiles."""
    blk_rows, width = x_ref.shape

    # Hoisted scalars (read once; not re-broadcast per sub-tile).
    loc = params_ref[0]
    scale = params_ref[1]
    seed_mix = seed_ref[0].astype(jnp.uint32) * jnp.uint32(0x9E3779B9)
    row0 = pl.program_id(0) * blk_rows

    def lin_idx(nrows):
        # Linear index within a sub-tile (row-major over the slab).
        return (lax.broadcasted_iota(jnp.int32, (nrows, width), 0) * width
                + lax.broadcasted_iota(jnp.int32, (nrows, width), 1)
                ).astype(jnp.uint32)

    def emit(r, nrows, lin):
        # Global element index (uint32; wraps for tensors > 2^32 elements).
        base = (row0 + r).astype(jnp.uint32) * jnp.uint32(width)
        h = _hash32(lin + base, seed_mix)
        z = _std_normal_from_u(_uniform_from_bits(h))
        x = x_ref[pl.ds(r, nrows), :].astype(jnp.float32)
        o_ref[pl.ds(r, nrows), :] = (x + (loc + scale * z)).astype(o_ref.dtype)

    n_full = blk_rows // _SUB_ROWS
    rem = blk_rows % _SUB_ROWS

    if n_full > 0:
        lin = lin_idx(_SUB_ROWS)   # hoisted: identical pattern every sub-tile

        def body(j, carry):
            emit(pl.multiple_of(j * _SUB_ROWS, _SUB_ROWS), _SUB_ROWS, lin)
            return carry

        lax.fori_loop(0, n_full, body, 0, unroll=2)

    if rem:   # static: blk_rows is known at trace time
        emit(n_full * _SUB_ROWS, rem, lin_idx(rem))


def init_learnable_normal_noise_params(num_experts: int):
    """Replicates LearnableNormalNoiseGenerator.__init__ parameter init."""
    def _init(target, lo, hi):
        t = (target - lo) / (hi - lo)
        return math.log(t / (1.0 - t))
    loc_param = jnp.float32(_init(0.0, _LOC_MIN, _LOC_MAX))
    scale_param = jnp.float32(_init(1.0 / num_experts ** 2, _SCALE_MIN, _SCALE_MAX))
    return loc_param, scale_param


def learnable_normal_noise_generator(inputs: jax.Array,
                                     loc_param,
                                     scale_param,
                                     *,
                                     seed: int = 0,
                                     block_elems: int = _DEFAULT_BLOCK_ELEMS) -> jax.Array:
    """JAX/Pallas equivalent of LearnableNormalNoiseGenerator.forward."""
    # TODO(synk): add a custom_vjp for pathwise (rsample) gradients w.r.t. loc/scale
    # if this is used in training; only the forward pass is implemented here.

    # Scalar parameter constraints (trivial scalar math; outside the kernel).
    loc = _LOC_MIN + (_LOC_MAX - _LOC_MIN) * jax.nn.sigmoid(
        jnp.asarray(loc_param, jnp.float32))
    scale = _SCALE_MIN + (_SCALE_MAX - _SCALE_MIN) * jax.nn.sigmoid(
        jnp.asarray(scale_param, jnp.float32))
    params = jnp.stack([loc, scale]).astype(jnp.float32)   # (2,)  -> SMEM
    seed_arr = jnp.asarray([seed], dtype=jnp.int32)        # (1,)  -> SMEM

    orig_shape, out_dtype = inputs.shape, inputs.dtype
    n = inputs.size

    # Lane-dense 2-D slab. Try several widths so 128-aligned tensors never pay a
    # full-tensor pad copy; pad only as a last resort.
    width = next((w for w in _WIDTHS if n % w == 0), _LANE)
    pad = (-n) % width
    flat = inputs.reshape(-1)
    if pad:
        # TODO(synk): mask the ragged tail in-kernel (pass n via SMEM + masked
        # store) to avoid this extra HBM pass for n % 128 != 0.
        flat = jnp.pad(flat, (0, pad))
    rows = flat.size // width
    x2d = flat.reshape(rows, width)

    # Large row tiles amortize the ~0.35us fixed per-grid-step cost, but cap at
    # ~half the rows so the grid has >= 2 steps for v7x's two TensorCores.
    target_rows = max(_SUB_ROWS, (block_elems // width) // _SUB_ROWS * _SUB_ROWS)
    if rows <= _SUB_ROWS:
        row_tile = rows
    else:
        half = -(-((rows + 1) // 2) // _SUB_ROWS) * _SUB_ROWS  # ceil(rows/2) -> mult of 8
        row_tile = min(target_rows, half)
    grid = (pl.cdiv(rows, row_tile),)

    out2d = pl.pallas_call(
        _noise_add_kernel,
        out_shape=jax.ShapeDtypeStruct((rows, width), out_dtype),
        grid=grid,
        in_specs=[
            pl.BlockSpec(memory_space=pltpu.MemorySpace.SMEM),   # seed (1,) int32
            pl.BlockSpec(memory_space=pltpu.MemorySpace.SMEM),   # [loc, scale] (2,) f32
            pl.BlockSpec((row_tile, width), lambda i: (i, 0)),
        ],
        out_specs=pl.BlockSpec((row_tile, width), lambda i: (i, 0)),
        compiler_params=pltpu.CompilerParams(
            # Noise depends only on (seed, global index) -> grid steps independent;
            # lets v7x shard the grid across both TensorCores. Neutral on v5e/v6e.
            dimension_semantics=("parallel",),
        ),
    )(seed_arr, params, x2d)

    if pad:
        return out2d.reshape(-1)[:n].reshape(orig_shape)
    return out2d.reshape(orig_shape)


if __name__ == "__main__":
    num_experts = 4
    key = jax.random.PRNGKey(0)
    # Logits-like NCHW tensor: batch=2, channels(num_experts)=4, spatial 16x16.
    x = jax.random.normal(key, (2, num_experts, 16, 16), dtype=jnp.float32)

    loc_param, scale_param = init_learnable_normal_noise_params(num_experts)
    out = learnable_normal_noise_generator(x, loc_param, scale_param, seed=0)
    out = jax.block_until_ready(out)

    assert out.shape == x.shape and out.dtype == x.dtype
    noise = out - x
    assert bool(jnp.all(jnp.isfinite(noise)))
    # Noise should look like N(loc=0, scale=1/num_experts**2 = 0.0625).
    mean = float(jnp.mean(noise))
    std = float(jnp.std(noise))
    amax = float(jnp.max(jnp.abs(noise)))
    assert abs(mean) < 0.02, f"noise mean {mean}"
    assert 0.04 < std < 0.09, f"noise std {std}"
    assert amax < 0.5, f"noise |max| {amax}"

    # Tiling invariance: noise depends only on (seed, element index), so a
    # multi-block tiling (small block_elems, partial final block) must agree
    # with the default tiling on the same input.
    x2 = jax.random.normal(jax.random.PRNGKey(1), (2, num_experts, 16, 17),
                           dtype=jnp.float32)
    y_big = learnable_normal_noise_generator(x2, loc_param, scale_param, seed=3)
    y_small = learnable_normal_noise_generator(x2, loc_param, scale_param, seed=3,
                                               block_elems=1024)
    y_big, y_small = jax.block_until_ready((y_big, y_small))
    assert y_big.shape == x2.shape
    assert bool(jnp.allclose(y_big, y_small, rtol=1e-5, atol=1e-6))

    print("KERNEL_OK")
</pallas_src>

<mosaic_0001>
module attributes {stable_mosaic.version = 11 : i64} {
  func.func @_noise_add_kernel(%arg0: i32, %arg1: memref<1xi32, #tpu.memory_space<smem>>, %arg2: memref<2xf32, #tpu.memory_space<smem>>, %arg3: memref<2x1024xf32, #tpu.memory_space<vmem>>, %arg4: memref<2x1024xf32, #tpu.memory_space<vmem>>) attributes {dimension_semantics = [#tpu.dimension_semantics<parallel>], iteration_bounds = array<i64: 1>, scalar_prefetch = 0 : i64, scratch_operands = 0 : i64, tpu.core_type = #tpu.core_type<tc>, window_params = [{transform_indices = @transform_0, window_bounds = array<i64: 1>}, {transform_indices = @transform_1, window_bounds = array<i64: 2>}, {transform_indices = @transform_2, window_bounds = array<i64: 2, 1024>}, {transform_indices = @transform_3, window_bounds = array<i64: 2, 1024>}]} {
    %c0 = arith.constant 0 : index
    %0 = memref.load %arg2[%c0] : memref<2xf32, #tpu.memory_space<smem>>
    %c1 = arith.constant 1 : index
    %1 = memref.load %arg2[%c1] : memref<2xf32, #tpu.memory_space<smem>>
    %c0_0 = arith.constant 0 : index
    %2 = memref.load %arg1[%c0_0] : memref<1xi32, #tpu.memory_space<smem>>
    %c-1640531527_i32 = arith.constant -1640531527 : i32
    %3 = arith.muli %2, %c-1640531527_i32 : i32
    %c2_i32 = arith.constant 2 : i32
    %4 = arith.muli %arg0, %c2_i32 : i32
    %5 = tpu.iota {dimensions = array<i32: 0>} : vector<2x1024xi32>
    %c1024_i32 = arith.constant 1024 : i32
    %6 = vector.broadcast %c1024_i32 : i32 to vector<2x1024xi32>
    %7 = arith.muli %5, %6 : vector<2x1024xi32>
    %8 = tpu.iota {dimensions = array<i32: 1>} : vector<2x1024xi32>
    %9 = arith.addi %7, %8 : vector<2x1024xi32>
    %c0_i32 = arith.constant 0 : i32
    %10 = arith.addi %4, %c0_i32 : i32
    %c1024_i32_1 = arith.constant 1024 : i32
    %11 = arith.muli %10, %c1024_i32_1 : i32
    %12 = vector.broadcast %11 : i32 to vector<2x1024xi32>
    %13 = arith.addi %9, %12 : vector<2x1024xi32>
    %14 = vector.broadcast %3 : i32 to vector<2x1024xi32>
    %15 = arith.xori %13, %14 : vector<2x1024xi32>
    %c16_i32 = arith.constant 16 : i32
    %16 = vector.broadcast %c16_i32 : i32 to vector<2x1024xi32>
    %17 = arith.shrui %15, %16 : vector<2x1024xi32>
    %18 = arith.xori %15, %17 : vector<2x1024xi32>
    %c2146121005_i32 = arith.constant 2146121005 : i32
    %19 = vector.broadcast %c2146121005_i32 : i32 to vector<2x1024xi32>
    %20 = arith.muli %18, %19 : vector<2x1024xi32>
    %c15_i32 = arith.constant 15 : i32
    %21 = vector.broadcast %c15_i32 : i32 to vector<2x1024xi32>
    %22 = arith.shrui %20, %21 : vector<2x1024xi32>
    %23 = arith.xori %20, %22 : vector<2x1024xi32>
    %c-2073254261_i32 = arith.constant -2073254261 : i32
    %24 = vector.broadcast %c-2073254261_i32 : i32 to vector<2x1024xi32>
    %25 = arith.muli %23, %24 : vector<2x1024xi32>
    %c16_i32_2 = arith.constant 16 : i32
    %26 = vector.broadcast %c16_i32_2 : i32 to vector<2x1024xi32>
    %27 = arith.shrui %25, %26 : vector<2x1024xi32>
    %28 = arith.xori %25, %27 : vector<2x1024xi32>
    %c9_i32 = arith.constant 9 : i32
    %29 = vector.broadcast %c9_i32 : i32 to vector<2x1024xi32>
    %30 = arith.shrui %28, %29 : vector<2x1024xi32>
    %c1065353216_i32 = arith.constant 1065353216 : i32
    %31 = vector.broadcast %c1065353216_i32 : i32 to vector<2x1024xi32>
    %32 = arith.ori %30, %31 : vector<2x1024xi32>
    %33 = tpu.bitcast %32 : vector<2x1024xi32> -> vector<2x1024xf32>
    %cst = arith.constant 0.99999994 : f32
    %34 = vector.broadcast %cst : f32 to vector<2x1024xf32>
    %35 = arith.subf %33, %34 : vector<2x1024xf32>
    %cst_3 = arith.constant 5.000000e-01 : f32
    %36 = vector.broadcast %cst_3 : f32 to vector<2x1024xf32>
    %37 = arith.cmpf olt, %35, %36 : vector<2x1024xf32>
    %cst_4 = arith.constant 1.000000e+00 : f32
    %38 = vector.broadcast %cst_4 : f32 to vector<2x1024xf32>
    %39 = arith.subf %38, %35 : vector<2x1024xf32>
    %40 = arith.minimumf %35, %39 : vector<2x1024xf32>
    %41 = tpu.bitcast %40 : vector<2x1024xf32> -> vector<2x1024xi32>
    %c23_i32 = arith.constant 23 : i32
    %42 = vector.broadcast %c23_i32 : i32 to vector<2x1024xi32>
    %43 = arith.shrsi %41, %42 : vector<2x1024xi32>
    %c127_i32 = arith.constant 127 : i32
    %44 = vector.broadcast %c127_i32 : i32 to vector<2x1024xi32>
    %45 = arith.subi %43, %44 : vector<2x1024xi32>
    %46 = arith.sitofp %45 : vector<2x1024xi32> to vector<2x1024xf32>
    %c8388607_i32 = arith.constant 8388607 : i32
    %47 = vector.broadcast %c8388607_i32 : i32 to vector<2x1024xi32>
    %48 = arith.andi %41, %47 : vector<2x1024xi32>
    %c1065353216_i32_5 = arith.constant 1065353216 : i32
    %49 = vector.broadcast %c1065353216_i32_5 : i32 to vector<2x1024xi32>
    %50 = arith.ori %48, %49 : vector<2x1024xi32>
    %51 = tpu.bitcast %50 : vector<2x1024xi32> -> vector<2x1024xf32>
    %cst_6 = arith.constant 1.000000e+00 : f32
    %52 = vector.broadcast %cst_6 : f32 to vector<2x1024xf32>
    %53 = arith.subf %51, %52 : vector<2x1024xf32>
    %cst_7 = arith.constant 1.000000e+00 : f32
    %54 = vector.broadcast %cst_7 : f32 to vector<2x1024xf32>
    %55 = arith.addf %51, %54 : vector<2x1024xf32>
    %56 = tpu.reciprocal %55 {approx = true} : vector<2x1024xf32> -> vector<2x1024xf32>
    %57 = arith.mulf %53, %56 : vector<2x1024xf32>
    %58 = arith.mulf %57, %57 : vector<2x1024xf32>
    %cst_8 = arith.constant -8.000000e-01 : f32
    %59 = vector.broadcast %cst_8 : f32 to vector<2x1024xf32>
    %60 = arith.mulf %58, %59 : vector<2x1024xf32>
    %cst_9 = arith.constant -1.33333337 : f32
    %61 = vector.broadcast %cst_9 : f32 to vector<2x1024xf32>
    %62 = arith.addf %61, %60 : vector<2x1024xf32>
    %63 = arith.mulf %58, %62 : vector<2x1024xf32>
    %cst_10 = arith.constant -4.000000e+00 : f32
    %64 = vector.broadcast %cst_10 : f32 to vector<2x1024xf32>
    %65 = arith.addf %64, %63 : vector<2x1024xf32>
    %66 = arith.mulf %57, %65 : vector<2x1024xf32>
    %cst_11 = arith.constant -1.38629436 : f32
    %67 = vector.broadcast %cst_11 : f32 to vector<2x1024xf32>
    %68 = arith.mulf %46, %67 : vector<2x1024xf32>
    %69 = arith.addf %68, %66 : vector<2x1024xf32>
    %70 = math.rsqrt %69 : vector<2x1024xf32>
    %71 = arith.mulf %69, %70 : vector<2x1024xf32>
    %cst_12 = arith.constant 1.032800e-02 : f32
    %72 = vector.broadcast %cst_12 : f32 to vector<2x1024xf32>
    %73 = arith.mulf %71, %72 : vector<2x1024xf32>
    %cst_13 = arith.constant 0.802852988 : f32
    %74 = vector.broadcast %cst_13 : f32 to vector<2x1024xf32>
    %75 = arith.addf %74, %73 : vector<2x1024xf32>
    %76 = arith.mulf %71, %75 : vector<2x1024xf32>
    %cst_14 = arith.constant 2.515517 : f32
    %77 = vector.broadcast %cst_14 : f32 to vector<2x1024xf32>
    %78 = arith.addf %77, %76 : vector<2x1024xf32>
    %cst_15 = arith.constant 1.308000e-03 : f32
    %79 = vector.broadcast %cst_15 : f32 to vector<2x1024xf32>
    %80 = arith.mulf %71, %79 : vector<2x1024xf32>
    %cst_16 = arith.constant 1.892690e-01 : f32
    %81 = vector.broadcast %cst_16 : f32 to vector<2x1024xf32>
    %82 = arith.addf %81, %80 : vector<2x1024xf32>
    %83 = arith.mulf %71, %82 : vector<2x1024xf32>
    %cst_17 = arith.constant 1.43278801 : f32
    %84 = vector.broadcast %cst_17 : f32 to vector<2x1024xf32>
    %85 = arith.addf %84, %83 : vector<2x1024xf32>
    %86 = arith.mulf %71, %85 : vector<2x1024xf32>
    %cst_18 = arith.constant 1.000000e+00 : f32
    %87 = vector.broadcast %cst_18 : f32 to vector<2x1024xf32>
    %88 = arith.addf %87, %86 : vector<2x1024xf32>
    %89 = tpu.reciprocal %88 {approx = true} : vector<2x1024xf32> -> vector<2x1024xf32>
    %90 = arith.mulf %78, %89 : vector<2x1024xf32>
    %91 = arith.subf %71, %90 : vector<2x1024xf32>
    %cst_19 = arith.constant 0.000000e+00 : f32
    %92 = vector.broadcast %cst_19 : f32 to vector<2x1024xf32>
    %93 = arith.subf %92, %91 : vector<2x1024xf32>
    %94 = arith.select %37, %93, %91 : vector<2x1024xi1>, vector<2x1024xf32>
    %c0_20 = arith.constant 0 : index
    %c0_21 = arith.constant 0 : index
    %95 = vector.load %arg3[%c0_20, %c0_21] : memref<2x1024xf32, #tpu.memory_space<vmem>>, vector<2x1024xf32>
    %96 = vector.broadcast %1 : f32 to vector<2x1024xf32>
    %97 = arith.mulf %96, %94 : vector<2x1024xf32>
    %98 = vector.broadcast %0 : f32 to vector<2x1024xf32>
    %99 = arith.addf %98, %97 : vector<2x1024xf32>
    %100 = arith.addf %95, %99 : vector<2x1024xf32>
    %c0_22 = arith.constant 0 : index
    %c0_23 = arith.constant 0 : index
    %101 = vector.load %arg4[%c0_22, %c0_23] : memref<2x1024xf32, #tpu.memory_space<vmem>>, vector<2x1024xf32>
    tpu.vector_store %arg4[%c0_22, %c0_23], %100 {strides = array<i32>} : memref<2x1024xf32, #tpu.memory_space<vmem>>, vector<2x1024xf32>,
    return
  }
  func.func @transform_0(%arg0: i32) -> i32 {
    %c0_i32 = arith.constant 0 : i32
    %c0_i32_0 = arith.constant 0 : i32
    return %c0_i32 : i32
  }
  func.func @transform_1(%arg0: i32) -> i32 {
    %c0_i32 = arith.constant 0 : i32
    %c0_i32_0 = arith.constant 0 : i32
    return %c0_i32 : i32
  }
  func.func @transform_2(%arg0: i32) -> (i32, i32) {
    %c0_i32 = arith.constant 0 : i32
    %c0_i32_0 = arith.constant 0 : i32
    return %arg0, %c0_i32 : i32, i32
  }
  func.func @transform_3(%arg0: i32) -> (i32, i32) {
    %c0_i32 = arith.constant 0 : i32
    %c0_i32_0 = arith.constant 0 : i32
    return %arg0, %c0_i32 : i32, i32
  }
}

</mosaic_0001>

<llo_original>
// kernel: tpu_custom_call.1
$region0: #{tpu_custom_call.1}
  #allocation0 [shape = 'u32[]', space=smem, size = 0x4, offset = 0x4, fixed_abs, tag = 'smem constant byte address 0x4 - core index']
  #allocation1 [shape = 'u32[72,128]{1,0:T(1,128)}', space=vmem, size = 0x9000, scoped, tag = 'internal scratch']
  #allocation2 [shape = 's32[1]{0:T(128)S(6)}', space=smem, size = 0x200, scoped, tag = 'scoped memory for tpu_custom_call.1']
  %s0 = inlined_call_operand.<no memory space> [shape: s32[1], index: 0, kind: input, shape index: {}]
  %s1 = inlined_call_operand.vmem [shape: f32[2], index: 1, kind: input, shape index: {}]
  %s2 = inlined_call_operand.hbm [shape: f32[2,1024], index: 2, kind: input, shape index: {}]
  %s3 = inlined_call_operand.hbm [shape: f32[2,1024], index: 3, kind: output, shape index: {}]
  %s4 = sld [smem:[#allocation0]]
  $region30: #{tpu_custom_call.1} parent=0
    _
  %s6 = ssub.s32 1, %s4
  %s7 = scalar_select 0, %s6, %s4
  %8 = sst [smem:[#allocation2]] %s0
  $region1: #{tpu_custom_call.1} parent=0
    #allocation3 [shape = 'u8[512]{0}', space=smem, size = 0x200, scoped, tag = 'input window, operand 1, single buffered']
    #allocation4 [shape = 's32[1]{0}', space=sflag, size = 0x4, scoped, tag = 'scoped memory for tpu_custom_call.1']
    #allocation5 [shape = 's32[1]{0}', space=sflag, size = 0x4, scoped, tag = 'scoped memory for tpu_custom_call.1']
    #allocation6 [shape = 's32[1]{0}', space=sflag, size = 0x4, scoped, tag = 'scoped memory for tpu_custom_call.1']
    #allocation7 [shape = 'u8[8192]{0}', space=vmem, size = 0x2000, scoped, tag = 'input window, operand 2, single buffered']
    #allocation8 [shape = 'u8[8192]{0}', space=vmem, size = 0x2000, scoped, tag = 'output window, operand 0, single buffered']
    %9 = vsyncpa [#allocation6], 0
    %10 = vsyncpa [#allocation4], 0
    %11 = vsyncpa [#allocation5], 0
    // Predicated region
    $region2: #{tpu_custom_call.1} parent=1 // pred_check
      _
    $region3: #{tpu_custom_call.1} parent=1 // pred_check_branch
      %13 = sbr.rel (0) target = $region5
    $region4: #{tpu_custom_call.1} parent=1 // pred_region
      _
    $region5: #{tpu_custom_call.1} parent=1 // pred_fallthru
      _
    // Predicated region
    $region6: #{tpu_custom_call.1} parent=1 // pred_check
      _
    $region7: #{tpu_custom_call.1} parent=1 // pred_check_branch
      %15 = sbr.rel (0) target = $region9
    $region8: #{tpu_custom_call.1} parent=1 // pred_region
      %17 = vsyncadd [#allocation6], 0
      %s19 = sshll.u32 %s1, 4
      %s20 = int_to_ptr.vmem [resolvable:$true] %s19
      %22 = dma.vmem_to_smem %s20, 16, [#allocation3], [#allocation6]
    $region9: #{tpu_custom_call.1} parent=1 // pred_fallthru
      _
    // Predicated region
    $region10: #{tpu_custom_call.1} parent=1 // pred_check
      _
    $region11: #{tpu_custom_call.1} parent=1 // pred_check_branch
      %24 = sbr.rel (0) target = $region13
    $region12: #{tpu_custom_call.1} parent=1 // pred_region
      %26 = vsyncadd [#allocation4], 0
      %s28 = sshll.u32 %s2, 4
      %s29 = int_to_ptr.hbm [resolvable:$true] %s28
      %s30 = sshll.u32 [#allocation7], 4
      %s31 = int_to_ptr.vmem [resolvable:$true] %s30
      %33 = dma.hbm_to_vmem [thread:$0]  %s29, 256, %s31, [#allocation4]
    $region13: #{tpu_custom_call.1} parent=1 // pred_fallthru
      _
    // Predicated region
    $region14: #{tpu_custom_call.1} parent=1 // pred_check
      _
    $region15: #{tpu_custom_call.1} parent=1 // pred_check_branch
      %35 = sbr.rel (0) target = $region17
    $region16: #{tpu_custom_call.1} parent=1 // pred_region
      %37 = dma.done [#allocation6], 16
    $region17: #{tpu_custom_call.1} parent=1 // pred_fallthru
      _
    // Predicated region
    $region18: #{tpu_custom_call.1} parent=1 // pred_check
      _
    $region19: #{tpu_custom_call.1} parent=1 // pred_check_branch
      %39 = sbr.rel (0) target = $region21
    $region20: #{tpu_custom_call.1} parent=1 // pred_region
      %41 = dma.done [#allocation4], 256
    $region21: #{tpu_custom_call.1} parent=1 // pred_fallthru
      _
    %42 = sfence
    %s43 = sld [smem:[#allocation3]]
    %s44 = sld [smem:[#allocation3 + $0x1]]
    %s45 = sld [smem:[#allocation2]]
    %s46 = smul.u32 %s45, 2654435769
    %v47 = vlaneseq
    %v48 = vshrl.u32 %v47, 7
    %v49 = vmul.u32 %v48, 1024
    %v50 = vlaneseq
    %v51 = vand.u32 %v50, 127
    %v52 = vadd.s32 %v51, 128
    %v53 = vadd.s32 %v51, 256
    %v54 = vadd.s32 %v51, 384
    %v55 = vadd.s32 %v51, 512
    %v56 = vadd.s32 %v51, 640
    %v57 = vadd.s32 %v51, 768
    %v58 = vadd.s32 %v51, 896
    %v59 = vadd.s32 %v49, %v51
    %v60 = vadd.s32 %v49, %v52
    %v61 = vadd.s32 %v49, %v53
    %v62 = vadd.s32 %v49, %v54
    %v63 = vadd.s32 %v49, %v55
    %v64 = vadd.s32 %v49, %v56
    %v65 = vadd.s32 %v49, %v57
    %v66 = vadd.s32 %v49, %v58
    %s67 = smul.u32 0, 2048
    %v68 = vstv %s67
    %v69 = vadd.s32 %v59, %v68
    %v70 = vadd.s32 %v60, %v68
    %v71 = vadd.s32 %v61, %v68
    %v72 = vadd.s32 %v62, %v68
    %v73 = vadd.s32 %v63, %v68
    %v74 = vadd.s32 %v64, %v68
    %v75 = vadd.s32 %v65, %v68
    %v76 = vadd.s32 %v66, %v68
    %v77 = vstv %s46
    %v78 = vxor.u32 %v69, %v77
    %v79 = vxor.u32 %v70, %v77
    %v80 = vxor.u32 %v71, %v77
    %v81 = vxor.u32 %v72, %v77
    %v82 = vxor.u32 %v73, %v77
    %v83 = vxor.u32 %v74, %v77
    %v84 = vxor.u32 %v75, %v77
    %v85 = vxor.u32 %v76, %v77
    %v86 = vshrl.u32 %v78, 16
    %v87 = vshrl.u32 %v79, 16
    %v88 = vshrl.u32 %v80, 16
    %v89 = vshrl.u32 %v81, 16
    %v90 = vshrl.u32 %v82, 16
    %v91 = vshrl.u32 %v83, 16
    %v92 = vshrl.u32 %v84, 16
    %v93 = vshrl.u32 %v85, 16
    %v94 = vxor.u32 %v78, %v86
    %v95 = vxor.u32 %v79, %v87
    %v96 = vxor.u32 %v80, %v88
    %v97 = vxor.u32 %v81, %v89
    %v98 = vxor.u32 %v82, %v90
    %v99 = vxor.u32 %v83, %v91
    %v100 = vxor.u32 %v84, %v92
    %v101 = vxor.u32 %v85, %v93
    %v102 = vmul.u32 %v94, 2146121005
    %v103 = vmul.u32 %v95, 2146121005
    %v104 = vmul.u32 %v96, 2146121005
    %v105 = vmul.u32 %v97, 2146121005
    %v106 = vmul.u32 %v98, 2146121005
    %v107 = vmul.u32 %v99, 2146121005
    %v108 = vmul.u32 %v100, 2146121005
    %v109 = vmul.u32 %v101, 2146121005
    %v110 = vshrl.u32 %v102, 15
    %v111 = vshrl.u32 %v103, 15
    %v112 = vshrl.u32 %v104, 15
    %v113 = vshrl.u32 %v105, 15
    %v114 = vshrl.u32 %v106, 15
    %v115 = vshrl.u32 %v107, 15
    %v116 = vshrl.u32 %v108, 15
    %v117 = vshrl.u32 %v109, 15
    %v118 = vxor.u32 %v102, %v110
    %v119 = vxor.u32 %v103, %v111
    %v120 = vxor.u32 %v104, %v112
    %v121 = vxor.u32 %v105, %v113
    %v122 = vxor.u32 %v106, %v114
    %v123 = vxor.u32 %v107, %v115
    %v124 = vxor.u32 %v108, %v116
    %v125 = vxor.u32 %v109, %v117
    %v126 = vmul.u32 %v118, 2221713035
    %v127 = vmul.u32 %v119, 2221713035
    %v128 = vmul.u32 %v120, 2221713035
    %v129 = vmul.u32 %v121, 2221713035
    %v130 = vmul.u32 %v122, 2221713035
    %v131 = vmul.u32 %v123, 2221713035
    %v132 = vmul.u32 %v124, 2221713035
    %v133 = vmul.u32 %v125, 2221713035
    %v134 = vshrl.u32 %v126, 16
    %v135 = vshrl.u32 %v127, 16
    %v136 = vshrl.u32 %v128, 16
    %v137 = vshrl.u32 %v129, 16
    %v138 = vshrl.u32 %v130, 16
    %v139 = vshrl.u32 %v131, 16
    %v140 = vshrl.u32 %v132, 16
    %v141 = vshrl.u32 %v133, 16
    %v142 = vxor.u32 %v126, %v134
    %v143 = vxor.u32 %v127, %v135
    %v144 = vxor.u32 %v128, %v136
    %v145 = vxor.u32 %v129, %v137
    %v146 = vxor.u32 %v130, %v138
    %v147 = vxor.u32 %v131, %v139
    %v148 = vxor.u32 %v132, %v140
    %v149 = vxor.u32 %v133, %v141
    %v150 = vshrl.u32 %v142, 9
    %v151 = vshrl.u32 %v143, 9
    %v152 = vshrl.u32 %v144, 9
    %v153 = vshrl.u32 %v145, 9
    %v154 = vshrl.u32 %v146, 9
    %v155 = vshrl.u32 %v147, 9
    %v156 = vshrl.u32 %v148, 9
    %v157 = vshrl.u32 %v149, 9
    %v158 = vor.u32 %v150, 1065353216
    %v159 = vor.u32 %v151, 1065353216
    %v160 = vor.u32 %v152, 1065353216
    %v161 = vor.u32 %v153, 1065353216
    %v162 = vor.u32 %v154, 1065353216
    %v163 = vor.u32 %v155, 1065353216
    %v164 = vor.u32 %v156, 1065353216
    %v165 = vor.u32 %v157, 1065353216
    %v174 = vsub.f32 %v158, 0.99999994
    %v175 = vsub.f32 %v159, 0.99999994
    %v176 = vsub.f32 %v160, 0.99999994
    %v177 = vsub.f32 %v161, 0.99999994
    %v178 = vsub.f32 %v162, 0.99999994
    %v179 = vsub.f32 %v163, 0.99999994
    %v180 = vsub.f32 %v164, 0.99999994
    %v181 = vsub.f32 %v165, 0.99999994
    %vm182 = vcmp.lt.f32.partialorder %v174, 0.5
    %vm183 = vcmp.lt.f32.partialorder %v175, 0.5
    %vm184 = vcmp.lt.f32.partialorder %v176, 0.5
    %vm185 = vcmp.lt.f32.partialorder %v177, 0.5
    %vm186 = vcmp.lt.f32.partialorder %v178, 0.5
    %vm187 = vcmp.lt.f32.partialorder %v179, 0.5
    %vm188 = vcmp.lt.f32.partialorder %v180, 0.5
    %vm189 = vcmp.lt.f32.partialorder %v181, 0.5
    %v190 = vsub.f32 1.0, %v174
    %v191 = vsub.f32 1.0, %v175
    %v192 = vsub.f32 1.0, %v176
    %v193 = vsub.f32 1.0, %v177
    %v194 = vsub.f32 1.0, %v178
    %v195 = vsub.f32 1.0, %v179
    %v196 = vsub.f32 1.0, %v180
    %v197 = vsub.f32 1.0, %v181
    %v198 = vmin.f32 %v174, %v190
    %v199 = vmin.f32 %v175, %v191
    %v200 = vmin.f32 %v176, %v192
    %v201 = vmin.f32 %v177, %v193
    %v202 = vmin.f32 %v178, %v194
    %v203 = vmin.f32 %v179, %v195
    %v204 = vmin.f32 %v180, %v196
    %v205 = vmin.f32 %v181, %v197
    %v214 = vshra.s32 %v198, 23
    %v215 = vshra.s32 %v199, 23
    %v216 = vshra.s32 %v200, 23
    %v217 = vshra.s32 %v201, 23
    %v218 = vshra.s32 %v202, 23
    %v219 = vshra.s32 %v203, 23
    %v220 = vshra.s32 %v204, 23
    %v221 = vshra.s32 %v205, 23
    %v222 = vsub.s32 %v214, 127
    %v223 = vsub.s32 %v215, 127
    %v224 = vsub.s32 %v216, 127
    %v225 = vsub.s32 %v217, 127
    %v226 = vsub.s32 %v218, 127
    %v227 = vsub.s32 %v219, 127
    %v228 = vsub.s32 %v220, 127
    %v229 = vsub.s32 %v221, 127
    %v230 = vcvt.s32.f32 %v222
    %v231 = vcvt.s32.f32 %v223
    %v232 = vcvt.s32.f32 %v224
    %v233 = vcvt.s32.f32 %v225
    %v234 = vcvt.s32.f32 %v226
    %v235 = vcvt.s32.f32 %v227
    %v236 = vcvt.s32.f32 %v228
    %v237 = vcvt.s32.f32 %v229
    %v238 = vand.u32 %v198, 8388607
    %v239 = vand.u32 %v199, 8388607
    %v240 = vand.u32 %v200, 8388607
    %v241 = vand.u32 %v201, 8388607
    %v242 = vand.u32 %v202, 8388607
    %v243 = vand.u32 %v203, 8388607
    %v244 = vand.u32 %v204, 8388607
    %v245 = vand.u32 %v205, 8388607
    %v246 = vor.u32 %v238, 1065353216
    %v247 = vor.u32 %v239, 1065353216
    %v248 = vor.u32 %v240, 1065353216
    %v249 = vor.u32 %v241, 1065353216
    %v250 = vor.u32 %v242, 1065353216
    %v251 = vor.u32 %v243, 1065353216
    %v252 = vor.u32 %v244, 1065353216
    %v253 = vor.u32 %v245, 1065353216
    %v262 = vsub.f32 %v246, 1.0
    %v263 = vsub.f32 %v247, 1.0
    %v264 = vsub.f32 %v248, 1.0
    %v265 = vsub.f32 %v249, 1.0
    %v266 = vsub.f32 %v250, 1.0
    %v267 = vsub.f32 %v251, 1.0
    %v268 = vsub.f32 %v252, 1.0
    %v269 = vsub.f32 %v253, 1.0
    %v270 = vadd.f32 %v246, 1.0
    %v271 = vadd.f32 %v247, 1.0
    %v272 = vadd.f32 %v248, 1.0
    %v273 = vadd.f32 %v249, 1.0
    %v274 = vadd.f32 %v250, 1.0
    %v275 = vadd.f32 %v251, 1.0
    %v276 = vadd.f32 %v252, 1.0
    %v277 = vadd.f32 %v253, 1.0
    %v278 = vrcp.pop %v270
    %v279 = vrcp.pop %v271
    %v280 = vrcp.pop %v272
    %v281 = vrcp.pop %v273
    %v282 = vrcp.pop %v274
    %v283 = vrcp.pop %v275
    %v284 = vrcp.pop %v276
    %v285 = vrcp.pop %v277
    %v286 = vmul.f32 %v262, %v278
    %v287 = vmul.f32 %v263, %v279
    %v288 = vmul.f32 %v264, %v280
    %v289 = vmul.f32 %v265, %v281
    %v290 = vmul.f32 %v266, %v282
    %v291 = vmul.f32 %v267, %v283
    %v292 = vmul.f32 %v268, %v284
    %v293 = vmul.f32 %v269, %v285
    %v294 = vmul.f32 %v286, %v286
    %v295 = vmul.f32 %v287, %v287
    %v296 = vmul.f32 %v288, %v288
    %v297 = vmul.f32 %v289, %v289
    %v298 = vmul.f32 %v290, %v290
    %v299 = vmul.f32 %v291, %v291
    %v300 = vmul.f32 %v292, %v292
    %v301 = vmul.f32 %v293, %v293
    %v302 = vmul.f32 %v294, -0.8
    %v303 = vmul.f32 %v295, -0.8
    %v304 = vmul.f32 %v296, -0.8
    %v305 = vmul.f32 %v297, -0.8
    %v306 = vmul.f32 %v298, -0.8
    %v307 = vmul.f32 %v299, -0.8
    %v308 = vmul.f32 %v300, -0.8
    %v309 = vmul.f32 %v301, -0.8
    %v310 = vadd.f32 %v302, -1.3333334
    %v311 = vadd.f32 %v303, -1.3333334
    %v312 = vadd.f32 %v304, -1.3333334
    %v313 = vadd.f32 %v305, -1.3333334
    %v314 = vadd.f32 %v306, -1.3333334
    %v315 = vadd.f32 %v307, -1.3333334
    %v316 = vadd.f32 %v308, -1.3333334
    %v317 = vadd.f32 %v309, -1.3333334
    %v318 = vmul.f32 %v294, %v310
    %v319 = vmul.f32 %v295, %v311
    %v320 = vmul.f32 %v296, %v312
    %v321 = vmul.f32 %v297, %v313
    %v322 = vmul.f32 %v298, %v314
    %v323 = vmul.f32 %v299, %v315
    %v324 = vmul.f32 %v300, %v316
    %v325 = vmul.f32 %v301, %v317
    %v326 = vadd.f32 %v318, -4.0
    %v327 = vadd.f32 %v319, -4.0
    %v328 = vadd.f32 %v320, -4.0
    %v329 = vadd.f32 %v321, -4.0
    %v330 = vadd.f32 %v322, -4.0
    %v331 = vadd.f32 %v323, -4.0
    %v332 = vadd.f32 %v324, -4.0
    %v333 = vadd.f32 %v325, -4.0
    %v334 = vmul.f32 %v286, %v326
    %v335 = vmul.f32 %v287, %v327
    %v336 = vmul.f32 %v288, %v328
    %v337 = vmul.f32 %v289, %v329
    %v338 = vmul.f32 %v290, %v330
    %v339 = vmul.f32 %v291, %v331
    %v340 = vmul.f32 %v292, %v332
    %v341 = vmul.f32 %v293, %v333
    %v342 = vmul.f32 %v230, -1.3862944
    %v343 = vmul.f32 %v231, -1.3862944
    %v344 = vmul.f32 %v232, -1.3862944
    %v345 = vmul.f32 %v233, -1.3862944
    %v346 = vmul.f32 %v234, -1.3862944
    %v347 = vmul.f32 %v235, -1.3862944
    %v348 = vmul.f32 %v236, -1.3862944
    %v349 = vmul.f32 %v237, -1.3862944
    %v350 = vadd.f32 %v342, %v334
    %v351 = vadd.f32 %v343, %v335
    %v352 = vadd.f32 %v344, %v336
    %v353 = vadd.f32 %v345, %v337
    %v354 = vadd.f32 %v346, %v338
    %v355 = vadd.f32 %v347, %v339
    %v356 = vadd.f32 %v348, %v340
    %v357 = vadd.f32 %v349, %v341
    %v358 = vrsqrt.pop %v350
    %v359 = vmul.f32 %v358, %v350
    %v360 = vmul.f32 %v359, %v358
    %v361 = vmul.f32 0.5, %v360
    %v362 = vsub.f32 1.5, %v361
    %v363 = vmul.f32 %v358, %v362
    %vm364 = vweird.f32 %v350
    %vm365 = vweird.f32 %v358
    %vm366 = vmor %vm364, %vm365
    %v367 = vsel %vm366, %v358, %v363
    %v368 = vrsqrt.pop %v351
    %v369 = vmul.f32 %v368, %v351
    %v370 = vmul.f32 %v369, %v368
    %v371 = vmul.f32 0.5, %v370
    %v372 = vsub.f32 1.5, %v371
    %v373 = vmul.f32 %v368, %v372
    %vm374 = vweird.f32 %v351
    %vm375 = vweird.f32 %v368
    %vm376 = vmor %vm374, %vm375
    %v377 = vsel %vm376, %v368, %v373
    %v378 = vrsqrt.pop %v352
    %v379 = vmul.f32 %v378, %v352
    %v380 = vmul.f32 %v379, %v378
    %v381 = vmul.f32 0.5, %v380
    %v382 = vsub.f32 1.5, %v381
    %v383 = vmul.f32 %v378, %v382
    %vm384 = vweird.f32 %v352
    %vm385 = vweird.f32 %v378
    %vm386 = vmor %vm384, %vm385
    %v387 = vsel %vm386, %v378, %v383
    %v388 = vrsqrt.pop %v353
    %v389 = vmul.f32 %v388, %v353
    %v390 = vmul.f32 %v389, %v388
    %v391 = vmul.f32 0.5, %v390
    %v392 = vsub.f32 1.5, %v391
    %v393 = vmul.f32 %v388, %v392
    %vm394 = vweird.f32 %v353
    %vm395 = vweird.f32 %v388
    %vm396 = vmor %vm394, %vm395
    %v397 = vsel %vm396, %v388, %v393
    %v398 = vrsqrt.pop %v354
    %v399 = vmul.f32 %v398, %v354
    %v400 = vmul.f32 %v399, %v398
    %v401 = vmul.f32 0.5, %v400
    %v402 = vsub.f32 1.5, %v401
    %v403 = vmul.f32 %v398, %v402
    %vm404 = vweird.f32 %v354
    %vm405 = vweird.f32 %v398
    %vm406 = vmor %vm404, %vm405
    %v407 = vsel %vm406, %v398, %v403
    %v408 = vrsqrt.pop %v355
    %v409 = vmul.f32 %v408, %v355
    %v410 = vmul.f32 %v409, %v408
    %v411 = vmul.f32 0.5, %v410
    %v412 = vsub.f32 1.5, %v411
    %v413 = vmul.f32 %v408, %v412
    %vm414 = vweird.f32 %v355
    %vm415 = vweird.f32 %v408
    %vm416 = vmor %vm414, %vm415
    %v417 = vsel %vm416, %v408, %v413
    %v418 = vrsqrt.pop %v356
    %v419 = vmul.f32 %v418, %v356
    %v420 = vmul.f32 %v419, %v418
    %v421 = vmul.f32 0.5, %v420
    %v422 = vsub.f32 1.5, %v421
    %v423 = vmul.f32 %v418, %v422
    %vm424 = vweird.f32 %v356
    %vm425 = vweird.f32 %v418
    %vm426 = vmor %vm424, %vm425
    %v427 = vsel %vm426, %v418, %v423
    %v428 = vrsqrt.pop %v357
    %v429 = vmul.f32 %v428, %v357
    %v430 = vmul.f32 %v429, %v428
    %v431 = vmul.f32 0.5, %v430
    %v432 = vsub.f32 1.5, %v431
    %v433 = vmul.f32 %v428, %v432
    %vm434 = vweird.f32 %v357
    %vm435 = vweird.f32 %v428
    %vm436 = vmor %vm434, %vm435
    %v437 = vsel %vm436, %v428, %v433
    %v438 = vmul.f32 %v350, %v367
    %v439 = vmul.f32 %v351, %v377
    %v440 = vmul.f32 %v352, %v387
    %v441 = vmul.f32 %v353, %v397
    %v442 = vmul.f32 %v354, %v407
    %v443 = vmul.f32 %v355, %v417
    %v444 = vmul.f32 %v356, %v427
    %v445 = vmul.f32 %v357, %v437
    %v446 = vmul.f32 %v438, 0.010328
    %v447 = vmul.f32 %v439, 0.010328
    %v448 = vmul.f32 %v440, 0.010328
    %v449 = vmul.f32 %v441, 0.010328
    %v450 = vmul.f32 %v442, 0.010328
    %v451 = vmul.f32 %v443, 0.010328
    %v452 = vmul.f32 %v444, 0.010328
    %v453 = vmul.f32 %v445, 0.010328
    %v454 = vadd.f32 %v446, 0.802853
    %v455 = vadd.f32 %v447, 0.802853
    %v456 = vadd.f32 %v448, 0.802853
    %v457 = vadd.f32 %v449, 0.802853
    %v458 = vadd.f32 %v450, 0.802853
    %v459 = vadd.f32 %v451, 0.802853
    %v460 = vadd.f32 %v452, 0.802853
    %v461 = vadd.f32 %v453, 0.802853
    %v462 = vmul.f32 %v438, %v454
    %v463 = vmul.f32 %v439, %v455
    %v464 = vmul.f32 %v440, %v456
    %v465 = vmul.f32 %v441, %v457
    %v466 = vmul.f32 %v442, %v458
    %v467 = vmul.f32 %v443, %v459
    %v468 = vmul.f32 %v444, %v460
    %v469 = vmul.f32 %v445, %v461
    %v470 = vadd.f32 %v462, 2.515517
    %v471 = vadd.f32 %v463, 2.515517
    %v472 = vadd.f32 %v464, 2.515517
    %v473 = vadd.f32 %v465, 2.515517
    %v474 = vadd.f32 %v466, 2.515517
    %v475 = vadd.f32 %v467, 2.515517
    %v476 = vadd.f32 %v468, 2.515517
    %v477 = vadd.f32 %v469, 2.515517
    %v478 = vmul.f32 %v438, 0.001308
    %v479 = vmul.f32 %v439, 0.001308
    %v480 = vmul.f32 %v440, 0.001308
    %v481 = vmul.f32 %v441, 0.001308
    %v482 = vmul.f32 %v442, 0.001308
    %v483 = vmul.f32 %v443, 0.001308
    %v484 = vmul.f32 %v444, 0.001308
    %v485 = vmul.f32 %v445, 0.001308
    %v486 = vadd.f32 %v478, 0.189269
    %v487 = vadd.f32 %v479, 0.189269
    %v488 = vadd.f32 %v480, 0.189269
    %v489 = vadd.f32 %v481, 0.189269
    %v490 = vadd.f32 %v482, 0.189269
    %v491 = vadd.f32 %v483, 0.189269
    %v492 = vadd.f32 %v484, 0.189269
    %v493 = vadd.f32 %v485, 0.189269
    %v494 = vmul.f32 %v438, %v486
    %v495 = vmul.f32 %v439, %v487
    %v496 = vmul.f32 %v440, %v488
    %v497 = vmul.f32 %v441, %v489
    %v498 = vmul.f32 %v442, %v490
    %v499 = vmul.f32 %v443, %v491
    %v500 = vmul.f32 %v444, %v492
    %v501 = vmul.f32 %v445, %v493
    %v502 = vadd.f32 %v494, 1.432788
    %v503 = vadd.f32 %v495, 1.432788
    %v504 = vadd.f32 %v496, 1.432788
    %v505 = vadd.f32 %v497, 1.432788
    %v506 = vadd.f32 %v498, 1.432788
    %v507 = vadd.f32 %v499, 1.432788
    %v508 = vadd.f32 %v500, 1.432788
    %v509 = vadd.f32 %v501, 1.432788
    %v510 = vmul.f32 %v438, %v502
    %v511 = vmul.f32 %v439, %v503
    %v512 = vmul.f32 %v440, %v504
    %v513 = vmul.f32 %v441, %v505
    %v514 = vmul.f32 %v442, %v506
    %v515 = vmul.f32 %v443, %v507
    %v516 = vmul.f32 %v444, %v508
    %v517 = vmul.f32 %v445, %v509
    %v518 = vadd.f32 %v510, 1.0
    %v519 = vadd.f32 %v511, 1.0
    %v520 = vadd.f32 %v512, 1.0
    %v521 = vadd.f32 %v513, 1.0
    %v522 = vadd.f32 %v514, 1.0
    %v523 = vadd.f32 %v515, 1.0
    %v524 = vadd.f32 %v516, 1.0
    %v525 = vadd.f32 %v517, 1.0
    %v526 = vrcp.pop %v518
    %v527 = vrcp.pop %v519
    %v528 = vrcp.pop %v520
    %v529 = vrcp.pop %v521
    %v530 = vrcp.pop %v522
    %v531 = vrcp.pop %v523
    %v532 = vrcp.pop %v524
    %v533 = vrcp.pop %v525
    %v534 = vmul.f32 %v470, %v526
    %v535 = vmul.f32 %v471, %v527
    %v536 = vmul.f32 %v472, %v528
    %v537 = vmul.f32 %v473, %v529
    %v538 = vmul.f32 %v474, %v530
    %v539 = vmul.f32 %v475, %v531
    %v540 = vmul.f32 %v476, %v532
    %v541 = vmul.f32 %v477, %v533
    %v542 = vsub.f32 %v438, %v534
    %v543 = vsub.f32 %v439, %v535
    %v544 = vsub.f32 %v440, %v536
    %v545 = vsub.f32 %v441, %v537
    %v546 = vsub.f32 %v442, %v538
    %v547 = vsub.f32 %v443, %v539
    %v548 = vsub.f32 %v444, %v540
    %v549 = vsub.f32 %v445, %v541
    %v550 = vsub.f32 0.0, %v542
    %v551 = vsub.f32 0.0, %v543
    %v552 = vsub.f32 0.0, %v544
    %v553 = vsub.f32 0.0, %v545
    %v554 = vsub.f32 0.0, %v546
    %v555 = vsub.f32 0.0, %v547
    %v556 = vsub.f32 0.0, %v548
    %v557 = vsub.f32 0.0, %v549
    %v558 = vsel %vm182, %v550, %v542
    %v559 = vsel %vm183, %v551, %v543
    %v560 = vsel %vm184, %v552, %v544
    %v561 = vsel %vm185, %v553, %v545
    %v562 = vsel %vm186, %v554, %v546
    %v563 = vsel %vm187, %v555, %v547
    %v564 = vsel %vm188, %v556, %v548
    %v565 = vsel %vm189, %v557, %v549
    %v566 = vld [vmem:[#allocation7] sm:$0xff]
    %v567 = vld [vmem:[#allocation7 + $0x8] sm:$0xff]
    %v568 = vstv %s44
    %v569 = vmul.f32 %v568, %v558
    %v570 = vmul.f32 %v568, %v559
    %v571 = vmul.f32 %v568, %v560
    %v572 = vmul.f32 %v568, %v561
    %v573 = vmul.f32 %v568, %v562
    %v574 = vmul.f32 %v568, %v563
    %v575 = vmul.f32 %v568, %v564
    %v576 = vmul.f32 %v568, %v565
    %v577 = vstv %s43
    %v578 = vadd.f32 %v577, %v569
    %v579 = vadd.f32 %v577, %v570
    %v580 = vadd.f32 %v577, %v571
    %v581 = vadd.f32 %v577, %v572
    %v582 = vadd.f32 %v577, %v573
    %v583 = vadd.f32 %v577, %v574
    %v584 = vadd.f32 %v577, %v575
    %v585 = vadd.f32 %v577, %v576
    %v594 = vrot.slane %v579, 6
    %v595 = vrot.slane %v580, 4
    %v596 = vrot.slane %v581, 2
    %v597 = vrot.slane %v583, 6
    %v598 = vrot.slane %v584, 4
    %v599 = vrot.slane %v585, 2
    %vm600 = vcmask 1041408
    %v601 = vsel %vm600, %v578, %v594
    %vm602 = vcmask 1045508
    %v603 = vsel %vm602, %v595, %v596
    %vm604 = vcmask 1043456
    %v605 = vsel %vm604, %v601, %v603
    %v606 = vsel %vm600, %v582, %v597
    %v607 = vsel %vm602, %v598, %v599
    %v608 = vsel %vm604, %v606, %v607
    %v611 = vadd.f32 %v566, %v605
    %v612 = vadd.f32 %v567, %v608
    %613 = vst [vmem:[#allocation8] sm:$0xff] %v611
    %614 = vst [vmem:[#allocation8 + $0x8] sm:$0xff] %v612
    // Predicated region
    $region22: #{tpu_custom_call.1} parent=1 // pred_check
      _
    $region23: #{tpu_custom_call.1} parent=1 // pred_check_branch
      %616 = sbr.rel (0) target = $region25
    $region24: #{tpu_custom_call.1} parent=1 // pred_region
      %618 = vsyncadd [#allocation5], 0
      %s620 = sshll.u32 [#allocation8], 4
      %s621 = int_to_ptr.vmem [resolvable:$true] %s620
      %s622 = sshll.u32 %s3, 4
      %s623 = int_to_ptr.hbm [resolvable:$true] %s622
      %625 = dma.vmem_to_hbm [thread:$0]  %s621, 256, %s623, [#allocation5]
    $region25: #{tpu_custom_call.1} parent=1 // pred_fallthru
      _
    // Predicated region
    $region26: #{tpu_custom_call.1} parent=1 // pred_check
      _
    $region27: #{tpu_custom_call.1} parent=1 // pred_check_branch
      %627 = sbr.rel (0) target = $region29
    $region28: #{tpu_custom_call.1} parent=1 // pred_region
      %629 = dma.done [#allocation5], 256
    $region29: #{tpu_custom_call.1} parent=1 // pred_fallthru
      _
    %630 = vsyncpa [#allocation4], 1
    %631 = vsyncpa [#allocation5], 1
    %632 = vsyncpa [#allocation6], 1

</llo_original>
